<compile_context>
chip_gen: v6e
topology: v6e:2x2x1
jax: 0.10.0
libtpu: 0.0.40
codegen_flags: <defaults>
</compile_context>

<pallas_src>
import jax
import jax.numpy as jnp
import numpy as np
from jax.experimental import pallas as pl
from jax.experimental.pallas import tpu as pltpu

INV_GAUSS_VAR = 0.54

W = 512          # lanes per row (multiple of 128)
TR_MAX = 1024    # max sublane-rows per grid step (multiple of 8).
                 # Per-step HBM traffic = 12*TR*W ~ 6.3 MB; double-buffered
                 # VMEM = 24*TR*W ~ 12.6 MiB: safe on v5e (16 MiB scoped
                 # default) and v6e/v7x (32 MiB), large enough that the
                 # ~0.35 us per-step grid overhead stays small even at
                 # v7x's 3.2 TB/s HBM.


def make_my_gaussian_pdf(mu, c=1.0):
    """Build the Pallas forward for MyGaussianPDF(mu).  mu: length-2 vector."""
    mu = np.asarray(mu, dtype=np.float32).reshape(-1)
    assert mu.shape == (2,), "MyGaussianPDF is defined for 2-D points"
    mu0, mu1 = float(mu[0]), float(mu[1])
    c = float(c)                                  # module's self.c
    neg_half_var = float(-0.5 * INV_GAUSS_VAR)    # -0.27, single folded literal

    def _kernel(xt_ref, o_ref):
        # xt_ref: (2, TR, W) f32 block of x^T; o_ref: (TR, W) f32 output block.
        d0 = xt_ref[0] - mu0                      # (TR, W)  VPU
        d1 = xt_ref[1] - mu1                      # (TR, W)  VPU
        r = jnp.exp(neg_half_var * (d0 * d0 + d1 * d1))   # EUP exp
        if c != 1.0:                              # folded out when c == 1.0
            r = c * r
        o_ref[...] = r

    def forward(x):
        """x: (N, 2) -> (N,) float32."""
        n, d = x.shape
        assert d == 2, "MyGaussianPDF is defined for 2-D points"

        # Row/tile geometry: rows of W lanes, TR sublane-rows per grid step.
        r = pl.cdiv(n, W)                     # rows of W points needed
        r8 = 8 * pl.cdiv(r, 8)                # round up to vreg sublane granule
        tr = min(TR_MAX, r8)
        if r8 >= 16:                          # guarantee >=2 grid steps so the
            tr = min(tr, 8 * pl.cdiv(r8, 16))  # "parallel" axis splits on v7x
        n_rows = tr * pl.cdiv(r8, tr)
        n_pad = n_rows * W
        grid = (n_rows // tr,)

        # Lane+sublane-dense SoA layout: (N,2) -> (2,N) -> pad -> (2, R, W).
        # TODO(synk): fuse this wrapper-side transpose/pad into the kernel
        # (in-kernel pair-sum via pltpu.roll + lane compaction) to remove the
        # extra XLA memory pass (~16 B/elem on top of the kernel's 12 B/elem).
        xt = jnp.transpose(x.astype(jnp.float32))          # (2, N)
        if n_pad != n:
            xt = jnp.pad(xt, ((0, 0), (0, n_pad - n)))
        xt3 = xt.reshape(2, n_rows, W)                     # free reshape

        out = pl.pallas_call(
            _kernel,
            out_shape=jax.ShapeDtypeStruct((n_rows, W), jnp.float32),
            grid=grid,
            in_specs=[pl.BlockSpec((2, tr, W), lambda i: (0, i, 0))],
            out_specs=pl.BlockSpec((tr, W), lambda i: (i, 0)),
            compiler_params=pltpu.CompilerParams(
                dimension_semantics=("parallel",),
                vmem_limit_bytes=32 << 20),
            cost_estimate=pl.CostEstimate(
                flops=6 * n_pad,
                transcendentals=n_pad,
                bytes_accessed=12 * n_pad),
        )(xt3)

        flat = out.reshape(n_pad)
        return flat if n_pad == n else flat[:n]

    return forward


if __name__ == "__main__":
    key = jax.random.PRNGKey(0)
    N, D = 16, 2

    # mu is the module's constructor argument (a fixed constant, not learned).
    mu = jnp.array([0.5, -0.25], dtype=jnp.float32)

    # Example input batch of 2-D points.
    x = jax.random.normal(key, (N, D), dtype=jnp.float32)

    pdf = make_my_gaussian_pdf(mu)              # self.c == 1.0
    out = jax.block_until_ready(pdf(x))

    # Pure-numpy reference of the PyTorch forward.
    d_np = np.asarray(x) - np.asarray(mu)[None, :]
    cov_np = INV_GAUSS_VAR * np.eye(D, dtype=np.float32)
    ref = 1.0 * np.exp(-0.5 * np.diagonal(d_np @ cov_np @ d_np.T))

    assert out.shape == (N,)
    assert np.allclose(np.asarray(out), ref, rtol=1e-5, atol=1e-6)
    print("KERNEL_OK")
</pallas_src>

<mosaic_0001>
module attributes {stable_mosaic.version = 11 : i64} {
  func.func @_kernel(%arg0: i32, %arg1: memref<2x8x512xf32, #tpu.memory_space<vmem>>, %arg2: memref<8x512xf32, #tpu.memory_space<vmem>>) attributes {dimension_semantics = [#tpu.dimension_semantics<parallel>], iteration_bounds = array<i64: 1>, scalar_prefetch = 0 : i64, scratch_operands = 0 : i64, tpu.core_type = #tpu.core_type<tc>, window_params = [{transform_indices = @transform_0, window_bounds = array<i64: 2, 8, 512>}, {transform_indices = @transform_1, window_bounds = array<i64: 8, 512>}]} {
    %c0 = arith.constant 0 : index
    %c0_0 = arith.constant 0 : index
    %c0_1 = arith.constant 0 : index
    %0 = vector.load %arg1[%c0, %c0_0, %c0_1] : memref<2x8x512xf32, #tpu.memory_space<vmem>>, vector<1x8x512xf32>
    %1 = vector.shape_cast %0 : vector<1x8x512xf32> to vector<8x512xf32>
    %cst = arith.constant 5.000000e-01 : f32
    %2 = vector.broadcast %cst : f32 to vector<8x512xf32>
    %3 = arith.subf %1, %2 : vector<8x512xf32>
    %c1 = arith.constant 1 : index
    %c0_2 = arith.constant 0 : index
    %c0_3 = arith.constant 0 : index
    %4 = vector.load %arg1[%c1, %c0_2, %c0_3] : memref<2x8x512xf32, #tpu.memory_space<vmem>>, vector<1x8x512xf32>
    %5 = vector.shape_cast %4 : vector<1x8x512xf32> to vector<8x512xf32>
    %cst_4 = arith.constant -2.500000e-01 : f32
    %6 = vector.broadcast %cst_4 : f32 to vector<8x512xf32>
    %7 = arith.subf %5, %6 : vector<8x512xf32>
    %8 = arith.mulf %3, %3 : vector<8x512xf32>
    %9 = arith.mulf %7, %7 : vector<8x512xf32>
    %10 = arith.addf %8, %9 : vector<8x512xf32>
    %cst_5 = arith.constant -2.700000e-01 : f32
    %11 = vector.broadcast %cst_5 : f32 to vector<8x512xf32>
    %12 = arith.mulf %11, %10 : vector<8x512xf32>
    %13 = math.exp %12 : vector<8x512xf32>
    %c0_6 = arith.constant 0 : index
    %c0_7 = arith.constant 0 : index
    %14 = vector.load %arg2[%c0_6, %c0_7] : memref<8x512xf32, #tpu.memory_space<vmem>>, vector<8x512xf32>
    tpu.vector_store %arg2[%c0_6, %c0_7], %13 {strides = array<i32>} : memref<8x512xf32, #tpu.memory_space<vmem>>, vector<8x512xf32>,
    return
  }
  func.func @transform_0(%arg0: i32) -> (i32, i32, i32) {
    %c0_i32 = arith.constant 0 : i32
    %c0_i32_0 = arith.constant 0 : i32
    %c0_i32_1 = arith.constant 0 : i32
    return %c0_i32, %arg0, %c0_i32_0 : i32, i32, i32
  }
  func.func @transform_1(%arg0: i32) -> (i32, i32) {
    %c0_i32 = arith.constant 0 : i32
    %c0_i32_0 = arith.constant 0 : i32
    return %arg0, %c0_i32 : i32, i32
  }
}

</mosaic_0001>

<llo_original>
// kernel: tpu_custom_call.1
$region0: #{tpu_custom_call.1}
  #allocation0 [shape = 'u32[]', space=smem, size = 0x4, offset = 0x4, fixed_abs, tag = 'smem constant byte address 0x4 - core index']
  #allocation1 [shape = 'u32[144,128]{1,0:T(1,128)}', space=vmem, size = 0x12000, scoped, tag = 'internal scratch']
  %s0 = inlined_call_operand.hbm [shape: f32[2,8,512], index: 0, kind: input, shape index: {}]
  %s1 = inlined_call_operand.hbm [shape: f32[8,512], index: 1, kind: output, shape index: {}]
  %s2 = sld [smem:[#allocation0]]
  $region18: #{tpu_custom_call.1} parent=0
    _
  %s4 = ssub.s32 1, %s2
  %s5 = scalar_select 0, %s4, %s2
  $region1: #{tpu_custom_call.1} parent=0
    #allocation2 [shape = 'u8[32768]{0}', space=vmem, size = 0x8000, scoped, tag = 'input window, operand 0, single buffered']
    #allocation3 [shape = 's32[1]{0}', space=sflag, size = 0x4, scoped, tag = 'scoped memory for tpu_custom_call.1']
    #allocation4 [shape = 's32[1]{0}', space=sflag, size = 0x4, scoped, tag = 'scoped memory for tpu_custom_call.1']
    #allocation5 [shape = 'u8[16384]{0}', space=vmem, size = 0x4000, scoped, tag = 'output window, operand 0, single buffered']
    %6 = vsyncpa [#allocation3], 0
    %7 = vsyncpa [#allocation4], 0
    // Predicated region
    $region2: #{tpu_custom_call.1} parent=1 // pred_check
      _
    $region3: #{tpu_custom_call.1} parent=1 // pred_check_branch
      %9 = sbr.rel (0) target = $region5
    $region4: #{tpu_custom_call.1} parent=1 // pred_region
      %s11 = ssub.s32 1024, 1024
      %12 = vsyncadd [#allocation3], %s11
      %s13 = sshll.u32 [#allocation2], 4
      %s14 = int_to_ptr.vmem [resolvable:$true] %s13
      %19 = dma.hbm_to_vmem [thread:$0]  %s0, 1024, %s14, [#allocation3], 512, 512, 32
    $region5: #{tpu_custom_call.1} parent=1 // pred_fallthru
      _
    // Predicated region
    $region6: #{tpu_custom_call.1} parent=1 // pred_check
      _
    $region7: #{tpu_custom_call.1} parent=1 // pred_check_branch
      %21 = sbr.rel (0) target = $region9
    $region8: #{tpu_custom_call.1} parent=1 // pred_region
      %22 = dma.done [#allocation3], 1024
    $region9: #{tpu_custom_call.1} parent=1 // pred_fallthru
      _
    %v23 = vld [vmem:[#allocation2] sm:$0xff]
    %v24 = vld [vmem:[#allocation2 + $0x8] sm:$0xff]
    %v25 = vld [vmem:[#allocation2 + $0x10] sm:$0xff]
    %v26 = vld [vmem:[#allocation2 + $0x18] sm:$0xff]
    %v27 = vsub.f32 %v23, 0.5
    %v28 = vsub.f32 %v24, 0.5
    %v29 = vsub.f32 %v25, 0.5
    %v30 = vsub.f32 %v26, 0.5
    %s31 = scalar_lea.vmem [#allocation2], 32
    %v32 = vld [vmem:[%s31] sm:$0xff]
    %v33 = vld [vmem:[%s31 + $0x8] sm:$0xff]
    %v34 = vld [vmem:[%s31 + $0x10] sm:$0xff]
    %v35 = vld [vmem:[%s31 + $0x18] sm:$0xff]
    %v36 = vsub.f32 %v32, -0.25
    %v37 = vsub.f32 %v33, -0.25
    %v38 = vsub.f32 %v34, -0.25
    %v39 = vsub.f32 %v35, -0.25
    %v40 = vmul.f32 %v27, %v27
    %v41 = vmul.f32 %v28, %v28
    %v42 = vmul.f32 %v29, %v29
    %v43 = vmul.f32 %v30, %v30
    %v44 = vmul.f32 %v36, %v36
    %v45 = vmul.f32 %v37, %v37
    %v46 = vmul.f32 %v38, %v38
    %v47 = vmul.f32 %v39, %v39
    %v48 = vadd.f32 %v40, %v44
    %v49 = vadd.f32 %v41, %v45
    %v50 = vadd.f32 %v42, %v46
    %v51 = vadd.f32 %v43, %v47
    %v52 = vmul.f32 %v48, -0.27
    %v53 = vmul.f32 %v49, -0.27
    %v54 = vmul.f32 %v50, -0.27
    %v55 = vmul.f32 %v51, -0.27
    %v56 = vmul.f32 %v52, 1.442695
    %v57 = vpow.pop %v56
    %v58 = vmul.f32 %v53, 1.442695
    %v59 = vpow.pop %v58
    %v60 = vmul.f32 %v54, 1.442695
    %v61 = vpow.pop %v60
    %v62 = vmul.f32 %v55, 1.442695
    %v63 = vpow.pop %v62
    %64 = vst [vmem:[#allocation5] sm:$0xff] %v57
    %65 = vst [vmem:[#allocation5 + $0x8] sm:$0xff] %v59
    %66 = vst [vmem:[#allocation5 + $0x10] sm:$0xff] %v61
    %67 = vst [vmem:[#allocation5 + $0x18] sm:$0xff] %v63
    // Predicated region
    $region10: #{tpu_custom_call.1} parent=1 // pred_check
      _
    $region11: #{tpu_custom_call.1} parent=1 // pred_check_branch
      %69 = sbr.rel (0) target = $region13
    $region12: #{tpu_custom_call.1} parent=1 // pred_region
      %s71 = ssub.s32 512, 512
      %72 = vsyncadd [#allocation4], %s71
      %s74 = sshll.u32 [#allocation5], 4
      %s75 = int_to_ptr.vmem [resolvable:$true] %s74
      %77 = dma.vmem_to_hbm [thread:$0]  %s75, 512, %s1, [#allocation4]
    $region13: #{tpu_custom_call.1} parent=1 // pred_fallthru
      _
    // Predicated region
    $region14: #{tpu_custom_call.1} parent=1 // pred_check
      _
    $region15: #{tpu_custom_call.1} parent=1 // pred_check_branch
      %79 = sbr.rel (0) target = $region17
    $region16: #{tpu_custom_call.1} parent=1 // pred_region
      %80 = dma.done [#allocation4], 512
    $region17: #{tpu_custom_call.1} parent=1 // pred_fallthru
      _
    %81 = vsyncpa [#allocation3], 1
    %82 = vsyncpa [#allocation4], 1

</llo_original>
